<compile_context>
chip_gen: v7x
topology: tpu7x:2x2x1
jax: 0.10.0
libtpu: 0.0.40
codegen_flags: <defaults>
</compile_context>

<pallas_src>
import functools

import jax
import jax.numpy as jnp
from jax.experimental import pallas as pl
from jax.experimental.pallas import tpu as pltpu


def _round_up(n, m):
    return ((n + m - 1) // m) * m


# ---------------------------------------------------------------------------
# Kernel: both VAEs, straight-line, one invocation.
#   acts_ref : (2, b_p, dio_p + dlat_p)   [x | eps] per VAE
#   p_ref    : (2, n_rows, seg)           packed parameter slab per VAE
#   recon_ref: (2, b_p, dio_p)
#   lat_ref  : (2, b_p, 4*dlat_p)         [mean | log_var | z | var]
# ---------------------------------------------------------------------------
def _corvae_kernel(acts_ref, p_ref, recon_ref, lat_ref, *,
                   dio_p, dh_p, dlat_p, rows):
    r_enc, r_ml, r_dec1, r_dec2, r_bias = rows

    for v in range(2):  # static unroll: two independent VAEs
        x = acts_ref[v, :, :dio_p]
        eps = acts_ref[v, :, dio_p:dio_p + dlat_p]

        # ---- encoder hidden ------------------------------------------------
        w_enc = p_ref[v, r_enc:r_enc + dio_p, :dh_p]
        b_enc = p_ref[v, r_bias:r_bias + 1, :dh_p]
        h = jnp.dot(x, w_enc, preferred_element_type=jnp.float32)
        h = jnp.maximum(h + b_enc, 0.0)

        # ---- fused [mean | log_var] matmul ----------------------------------
        w_ml = p_ref[v, r_ml:r_ml + dh_p, :2 * dlat_p]
        b_ml = p_ref[v, r_bias + 1:r_bias + 2, :2 * dlat_p]
        ml = jnp.dot(h, w_ml, preferred_element_type=jnp.float32) + b_ml
        mean = ml[:, :dlat_p]
        log_var = ml[:, dlat_p:]

        # ---- reparameterization: one exp; var = std*std ---------------------
        std = jnp.exp(0.5 * log_var)
        var = std * std
        z = mean + std * eps

        # ---- decoder ---------------------------------------------------------
        w_dec1 = p_ref[v, r_dec1:r_dec1 + dlat_p, :dh_p]
        b_dec1 = p_ref[v, r_bias + 2:r_bias + 3, :dh_p]
        d = jnp.dot(z, w_dec1, preferred_element_type=jnp.float32)
        d = jnp.maximum(d + b_dec1, 0.0)

        w_dec2 = p_ref[v, r_dec2:r_dec2 + dh_p, :dio_p]
        b_dec2 = p_ref[v, r_bias + 3:r_bias + 4, :dio_p]
        logits = jnp.dot(d, w_dec2, preferred_element_type=jnp.float32) + b_dec2

        # numerically stable sigmoid (single exp on EUP, one divide)
        e = jnp.exp(-jnp.abs(logits))
        s = e / (1.0 + e)
        recon_ref[v] = jnp.where(logits >= 0.0, 1.0 - s, s)

        # lane-dense, 128-aligned latent stores: [mean | log_var | z | var]
        lat_ref[v, :, :2 * dlat_p] = ml
        lat_ref[v, :, 2 * dlat_p:3 * dlat_p] = z
        lat_ref[v, :, 3 * dlat_p:] = var


# ---------------------------------------------------------------------------
# Parameter packing (done ONCE): both VAEs' weights+biases into one slab.
# ---------------------------------------------------------------------------
def pack_corvae_params(params_x, params_y):
    def dims(p):
        din, dh = p["w_enc"].shape
        dlat = p["w_mu"].shape[1]
        dout = p["w_dec2"].shape[1]
        return din, dh, dlat, dout

    din_x, dh_x, dlat_x, dout_x = dims(params_x)
    din_y, dh_y, dlat_y, dout_y = dims(params_y)

    dio_p = _round_up(max(din_x, din_y, dout_x, dout_y), 128)
    dh_p = _round_up(max(dh_x, dh_y), 128)
    dlat_p = _round_up(max(dlat_x, dlat_y), 128)   # full-lane latent segment
    seg = max(dio_p, dh_p, 2 * dlat_p)

    # row layout inside the slab (all offsets multiples of 8)
    r_enc = 0
    r_ml = r_enc + dio_p
    r_dec1 = r_ml + dh_p
    r_dec2 = r_dec1 + dlat_p
    r_bias = r_dec2 + dh_p
    n_rows = r_bias + 8          # 4 bias rows, padded to a full sublane group

    def pack_one(p):
        dlat = p["w_mu"].shape[1]
        slab = jnp.zeros((n_rows, seg), jnp.float32)
        slab = slab.at[r_enc:r_enc + p["w_enc"].shape[0],
                       :p["w_enc"].shape[1]].set(p["w_enc"])
        slab = slab.at[r_ml:r_ml + p["w_mu"].shape[0], :dlat].set(p["w_mu"])
        slab = slab.at[r_ml:r_ml + p["w_lv"].shape[0],
                       dlat_p:dlat_p + dlat].set(p["w_lv"])
        slab = slab.at[r_dec1:r_dec1 + p["w_dec1"].shape[0],
                       :p["w_dec1"].shape[1]].set(p["w_dec1"])
        slab = slab.at[r_dec2:r_dec2 + p["w_dec2"].shape[0],
                       :p["w_dec2"].shape[1]].set(p["w_dec2"])
        slab = slab.at[r_bias + 0, :p["b_enc"].shape[1]].set(p["b_enc"][0])
        slab = slab.at[r_bias + 1, :dlat].set(p["b_mu"][0])
        slab = slab.at[r_bias + 1, dlat_p:dlat_p + dlat].set(p["b_lv"][0])
        slab = slab.at[r_bias + 2, :p["b_dec1"].shape[1]].set(p["b_dec1"][0])
        slab = slab.at[r_bias + 3, :p["b_dec2"].shape[1]].set(p["b_dec2"][0])
        return slab

    params = jnp.stack([pack_one(params_x), pack_one(params_y)], axis=0)
    meta = dict(dio_p=dio_p, dh_p=dh_p, dlat_p=dlat_p, seg=seg, n_rows=n_rows,
                rows=(r_enc, r_ml, r_dec1, r_dec2, r_bias),
                d_in=(din_x, din_y), d_out=(dout_x, dout_y),
                d_lat=(dlat_x, dlat_y))
    return dict(params=params, meta=meta)


# ---------------------------------------------------------------------------
# Forward wrapper
# ---------------------------------------------------------------------------
def corvae_forward(packed, x, y, eps_x, eps_y):
    meta = packed["meta"]
    dio_p, dh_p, dlat_p = meta["dio_p"], meta["dh_p"], meta["dlat_p"]
    din_x, din_y = meta["d_in"]
    dout_x, dout_y = meta["d_out"]
    dlat_x, dlat_y = meta["d_lat"]

    B = x.shape[0]
    b_p = _round_up(max(B, 8), 8)

    # One activation slab: [x | eps] per VAE, built with a single fused update.
    acts = jnp.zeros((2, b_p, dio_p + dlat_p), jnp.float32)
    acts = acts.at[0, :B, :din_x].set(x.astype(jnp.float32))
    acts = acts.at[0, :B, dio_p:dio_p + dlat_x].set(eps_x.astype(jnp.float32))
    acts = acts.at[1, :B, :din_y].set(y.astype(jnp.float32))
    acts = acts.at[1, :B, dio_p:dio_p + dlat_y].set(eps_y.astype(jnp.float32))

    kernel = functools.partial(_corvae_kernel, dio_p=dio_p, dh_p=dh_p,
                               dlat_p=dlat_p, rows=meta["rows"])

    out_shape = (jax.ShapeDtypeStruct((2, b_p, dio_p), jnp.float32),
                 jax.ShapeDtypeStruct((2, b_p, 4 * dlat_p), jnp.float32))

    flops = 2 * 2 * b_p * (dio_p * dh_p + dh_p * 2 * dlat_p
                           + dlat_p * dh_p + dh_p * dio_p)
    transcendentals = 2 * b_p * (dlat_p + dio_p)
    bytes_accessed = 4 * (int(acts.size) + int(packed["params"].size)
                          + 2 * b_p * dio_p + 2 * b_p * 4 * dlat_p)

    # No grid: whole arrays live in VMEM (total working set ~1 MiB), a single
    # kernel invocation, single-buffered copies in/out (2 input / 2 output DMAs).
    recon, lat = pl.pallas_call(
        kernel,
        out_shape=out_shape,
        in_specs=[pl.BlockSpec(memory_space=pltpu.MemorySpace.VMEM),
                  pl.BlockSpec(memory_space=pltpu.MemorySpace.VMEM)],
        out_specs=(pl.BlockSpec(memory_space=pltpu.MemorySpace.VMEM),
                   pl.BlockSpec(memory_space=pltpu.MemorySpace.VMEM)),
        cost_estimate=pl.CostEstimate(flops=flops,
                                      transcendentals=transcendentals,
                                      bytes_accessed=bytes_accessed),
    )(acts, packed["params"])

    def unpack(v, d_out, d_lat):
        output = recon[v, :B, :d_out]
        mean = lat[v, :B, 0:d_lat]
        log_var = lat[v, :B, dlat_p:dlat_p + d_lat]
        z = lat[v, :B, 2 * dlat_p:2 * dlat_p + d_lat]
        var = lat[v, :B, 3 * dlat_p:3 * dlat_p + d_lat]
        return output, z, mean, var, log_var

    return unpack(0, dout_x, dlat_x) + unpack(1, dout_y, dlat_y)


# ---------------------------------------------------------------------------
# Parameter init (PyTorch nn.Linear-like uniform), pure-JAX reference, driver
# ---------------------------------------------------------------------------
def make_vae_params(key, input_dim, hidden_dim, latent_dim, output_dim):
    keys = jax.random.split(key, 10)

    def lin(kw, kb, fan_in, fan_out):
        bound = 1.0 / jnp.sqrt(fan_in)
        w = jax.random.uniform(kw, (fan_in, fan_out), jnp.float32, -bound, bound)
        b = jax.random.uniform(kb, (1, fan_out), jnp.float32, -bound, bound)
        return w, b

    w_enc, b_enc = lin(keys[0], keys[1], input_dim, hidden_dim)
    w_mu, b_mu = lin(keys[2], keys[3], hidden_dim, latent_dim)
    w_lv, b_lv = lin(keys[4], keys[5], hidden_dim, latent_dim)
    w_dec1, b_dec1 = lin(keys[6], keys[7], latent_dim, hidden_dim)
    w_dec2, b_dec2 = lin(keys[8], keys[9], hidden_dim, output_dim)

    return dict(w_enc=w_enc, b_enc=b_enc, w_mu=w_mu, b_mu=b_mu,
                w_lv=w_lv, b_lv=b_lv, w_dec1=w_dec1, b_dec1=b_dec1,
                w_dec2=w_dec2, b_dec2=b_dec2)


def _reference_vae(x, eps, p):
    h = jnp.maximum(x @ p["w_enc"] + p["b_enc"], 0.0)
    mean = h @ p["w_mu"] + p["b_mu"]
    log_var = h @ p["w_lv"] + p["b_lv"]
    var = jnp.exp(log_var)
    z = mean + jnp.exp(0.5 * log_var) * eps
    d = jnp.maximum(z @ p["w_dec1"] + p["b_dec1"], 0.0)
    out = jax.nn.sigmoid(d @ p["w_dec2"] + p["b_dec2"])
    return out, z, mean, var, log_var


if __name__ == "__main__":
    # Small shapes consistent with the module's constructor arguments.
    batch = 8
    input_dim_x, hidden_dim_x, latent_dim_x = 16, 32, 8
    input_dim_y, hidden_dim_y, latent_dim_y = 24, 40, 12

    key = jax.random.PRNGKey(0)
    k_px, k_py, k_x, k_y, k_ex, k_ey = jax.random.split(key, 6)

    params_x = make_vae_params(k_px, input_dim_x, hidden_dim_x,
                               latent_dim_x, input_dim_x)
    params_y = make_vae_params(k_py, input_dim_y, hidden_dim_y,
                               latent_dim_y, input_dim_y)
    packed = pack_corvae_params(params_x, params_y)

    x = jax.random.normal(k_x, (batch, input_dim_x), jnp.float32)
    y = jax.random.normal(k_y, (batch, input_dim_y), jnp.float32)
    # reparameterization noise (passed in for determinism)
    eps_x = jax.random.normal(k_ex, (batch, latent_dim_x), jnp.float32)
    eps_y = jax.random.normal(k_ey, (batch, latent_dim_y), jnp.float32)

    fwd = jax.jit(functools.partial(corvae_forward, packed))
    outs = fwd(x, y, eps_x, eps_y)
    outs = jax.block_until_ready(outs)

    # Correctness check against a pure-JAX reference.
    ref_x = _reference_vae(x, eps_x, params_x)
    ref_y = _reference_vae(y, eps_y, params_y)
    refs = ref_x + ref_y
    for got, want in zip(outs, refs):
        assert got.shape == want.shape, (got.shape, want.shape)
        assert jnp.allclose(got, want, atol=1e-5, rtol=1e-5)

    print("KERNEL_OK")
</pallas_src>

<mosaic_0001>
module attributes {stable_mosaic.version = 11 : i64} {
  func.func @_corvae_kernel(%arg0: memref<2x8x256xf32, #tpu.memory_space<vmem>>, %arg1: memref<2x520x256xf32, #tpu.memory_space<vmem>>, %arg2: memref<2x8x128xf32, #tpu.memory_space<vmem>>, %arg3: memref<2x8x512xf32, #tpu.memory_space<vmem>>) attributes {dimension_semantics = [], scalar_prefetch = 0 : i64, scratch_operands = 0 : i64, tpu.core_type = #tpu.core_type<tc>} {
    %c0 = arith.constant 0 : index
    %c0_0 = arith.constant 0 : index
    %c0_1 = arith.constant 0 : index
    %0 = vector.load %arg0[%c0, %c0_0, %c0_1] : memref<2x8x256xf32, #tpu.memory_space<vmem>>, vector<1x8x128xf32>
    %1 = vector.shape_cast %0 : vector<1x8x128xf32> to vector<8x128xf32>
    %c0_2 = arith.constant 0 : index
    %c0_3 = arith.constant 0 : index
    %c128 = arith.constant 128 : index
    %2 = vector.load %arg0[%c0_2, %c0_3, %c128] : memref<2x8x256xf32, #tpu.memory_space<vmem>>, vector<1x8x128xf32>
    %3 = vector.shape_cast %2 : vector<1x8x128xf32> to vector<8x128xf32>
    %c0_4 = arith.constant 0 : index
    %c0_5 = arith.constant 0 : index
    %c0_6 = arith.constant 0 : index
    %4 = vector.load %arg1[%c0_4, %c0_5, %c0_6] : memref<2x520x256xf32, #tpu.memory_space<vmem>>, vector<1x128x128xf32>
    %5 = vector.shape_cast %4 : vector<1x128x128xf32> to vector<128x128xf32>
    %c0_7 = arith.constant 0 : index
    %c512 = arith.constant 512 : index
    %c0_8 = arith.constant 0 : index
    %6 = vector.load %arg1[%c0_7, %c512, %c0_8] : memref<2x520x256xf32, #tpu.memory_space<vmem>>, vector<1x1x128xf32>
    %7 = vector.shape_cast %6 : vector<1x1x128xf32> to vector<1x128xf32>
    %cst = arith.constant dense<0.000000e+00> : vector<8x128xf32>
    %8 = tpu.matmul %1, %5, %cst {dimension_numbers = #tpu.dot_dimension_numbers<[1], [0], [0], [1], [0, 0, 1, 1], [], []>} : vector<8x128xf32>, vector<128x128xf32>, vector<8x128xf32> -> vector<8x128xf32>
    %9 = vector.broadcast %7 : vector<1x128xf32> to vector<8x128xf32>
    %10 = arith.addf %8, %9 : vector<8x128xf32>
    %cst_9 = arith.constant 0.000000e+00 : f32
    %11 = vector.broadcast %cst_9 : f32 to vector<8x128xf32>
    %12 = arith.maximumf %10, %11 : vector<8x128xf32>
    %c0_10 = arith.constant 0 : index
    %c128_11 = arith.constant 128 : index
    %c0_12 = arith.constant 0 : index
    %13 = vector.load %arg1[%c0_10, %c128_11, %c0_12] : memref<2x520x256xf32, #tpu.memory_space<vmem>>, vector<1x128x256xf32>
    %14 = vector.shape_cast %13 : vector<1x128x256xf32> to vector<128x256xf32>
    %c0_13 = arith.constant 0 : index
    %c513 = arith.constant 513 : index
    %c0_14 = arith.constant 0 : index
    %15 = vector.load %arg1[%c0_13, %c513, %c0_14] : memref<2x520x256xf32, #tpu.memory_space<vmem>>, vector<1x1x256xf32>
    %16 = vector.shape_cast %15 : vector<1x1x256xf32> to vector<1x256xf32>
    %cst_15 = arith.constant dense<0.000000e+00> : vector<8x256xf32>
    %17 = tpu.matmul %12, %14, %cst_15 {dimension_numbers = #tpu.dot_dimension_numbers<[1], [0], [0], [1], [0, 0, 1, 1], [], []>} : vector<8x128xf32>, vector<128x256xf32>, vector<8x256xf32> -> vector<8x256xf32>
    %18 = vector.broadcast %16 : vector<1x256xf32> to vector<8x256xf32>
    %19 = arith.addf %17, %18 : vector<8x256xf32>
    %20 = vector.extract_strided_slice %19 {offsets = [0, 0], sizes = [8, 128], strides = [1, 1]} : vector<8x256xf32> to vector<8x128xf32>
    %21 = vector.extract_strided_slice %19 {offsets = [0, 128], sizes = [8, 128], strides = [1, 1]} : vector<8x256xf32> to vector<8x128xf32>
    %cst_16 = arith.constant 5.000000e-01 : f32
    %22 = vector.broadcast %cst_16 : f32 to vector<8x128xf32>
    %23 = arith.mulf %22, %21 : vector<8x128xf32>
    %24 = math.exp %23 : vector<8x128xf32>
    %25 = arith.mulf %24, %24 : vector<8x128xf32>
    %26 = arith.mulf %24, %3 : vector<8x128xf32>
    %27 = arith.addf %20, %26 : vector<8x128xf32>
    %c0_17 = arith.constant 0 : index
    %c256 = arith.constant 256 : index
    %c0_18 = arith.constant 0 : index
    %28 = vector.load %arg1[%c0_17, %c256, %c0_18] : memref<2x520x256xf32, #tpu.memory_space<vmem>>, vector<1x128x128xf32>
    %29 = vector.shape_cast %28 : vector<1x128x128xf32> to vector<128x128xf32>
    %c0_19 = arith.constant 0 : index
    %c514 = arith.constant 514 : index
    %c0_20 = arith.constant 0 : index
    %30 = vector.load %arg1[%c0_19, %c514, %c0_20] : memref<2x520x256xf32, #tpu.memory_space<vmem>>, vector<1x1x128xf32>
    %31 = vector.shape_cast %30 : vector<1x1x128xf32> to vector<1x128xf32>
    %cst_21 = arith.constant dense<0.000000e+00> : vector<8x128xf32>
    %32 = tpu.matmul %27, %29, %cst_21 {dimension_numbers = #tpu.dot_dimension_numbers<[1], [0], [0], [1], [0, 0, 1, 1], [], []>} : vector<8x128xf32>, vector<128x128xf32>, vector<8x128xf32> -> vector<8x128xf32>
    %33 = vector.broadcast %31 : vector<1x128xf32> to vector<8x128xf32>
    %34 = arith.addf %32, %33 : vector<8x128xf32>
    %cst_22 = arith.constant 0.000000e+00 : f32
    %35 = vector.broadcast %cst_22 : f32 to vector<8x128xf32>
    %36 = arith.maximumf %34, %35 : vector<8x128xf32>
    %c0_23 = arith.constant 0 : index
    %c384 = arith.constant 384 : index
    %c0_24 = arith.constant 0 : index
    %37 = vector.load %arg1[%c0_23, %c384, %c0_24] : memref<2x520x256xf32, #tpu.memory_space<vmem>>, vector<1x128x128xf32>
    %38 = vector.shape_cast %37 : vector<1x128x128xf32> to vector<128x128xf32>
    %c0_25 = arith.constant 0 : index
    %c515 = arith.constant 515 : index
    %c0_26 = arith.constant 0 : index
    %39 = vector.load %arg1[%c0_25, %c515, %c0_26] : memref<2x520x256xf32, #tpu.memory_space<vmem>>, vector<1x1x128xf32>
    %40 = vector.shape_cast %39 : vector<1x1x128xf32> to vector<1x128xf32>
    %cst_27 = arith.constant dense<0.000000e+00> : vector<8x128xf32>
    %41 = tpu.matmul %36, %38, %cst_27 {dimension_numbers = #tpu.dot_dimension_numbers<[1], [0], [0], [1], [0, 0, 1, 1], [], []>} : vector<8x128xf32>, vector<128x128xf32>, vector<8x128xf32> -> vector<8x128xf32>
    %42 = vector.broadcast %40 : vector<1x128xf32> to vector<8x128xf32>
    %43 = arith.addf %41, %42 : vector<8x128xf32>
    %44 = math.absf %43 : vector<8x128xf32>
    %cst_28 = arith.constant 0.000000e+00 : f32
    %45 = vector.broadcast %cst_28 : f32 to vector<8x128xf32>
    %46 = arith.subf %45, %44 : vector<8x128xf32>
    %47 = math.exp %46 : vector<8x128xf32>
    %cst_29 = arith.constant 1.000000e+00 : f32
    %48 = vector.broadcast %cst_29 : f32 to vector<8x128xf32>
    %49 = arith.addf %48, %47 : vector<8x128xf32>
    %50 = arith.divf %47, %49 : vector<8x128xf32>
    %cst_30 = arith.constant 0.000000e+00 : f32
    %51 = vector.broadcast %cst_30 : f32 to vector<8x128xf32>
    %52 = arith.cmpf oge, %43, %51 : vector<8x128xf32>
    %cst_31 = arith.constant 1.000000e+00 : f32
    %53 = vector.broadcast %cst_31 : f32 to vector<8x128xf32>
    %54 = arith.subf %53, %50 : vector<8x128xf32>
    %55 = arith.select %52, %54, %50 : vector<8x128xi1>, vector<8x128xf32>
    %c0_32 = arith.constant 0 : index
    %c0_33 = arith.constant 0 : index
    %c0_34 = arith.constant 0 : index
    %56 = vector.load %arg2[%c0_32, %c0_33, %c0_34] : memref<2x8x128xf32, #tpu.memory_space<vmem>>, vector<1x8x128xf32>
    %57 = vector.shape_cast %56 : vector<1x8x128xf32> to vector<8x128xf32>
    %58 = vector.shape_cast %55 : vector<8x128xf32> to vector<1x8x128xf32>
    tpu.vector_store %arg2[%c0_32, %c0_33, %c0_34], %58 {strides = array<i32>} : memref<2x8x128xf32, #tpu.memory_space<vmem>>, vector<1x8x128xf32>,
    %c0_35 = arith.constant 0 : index
    %c0_36 = arith.constant 0 : index
    %c0_37 = arith.constant 0 : index
    %59 = vector.load %arg3[%c0_35, %c0_36, %c0_37] : memref<2x8x512xf32, #tpu.memory_space<vmem>>, vector<1x8x256xf32>
    %60 = vector.shape_cast %59 : vector<1x8x256xf32> to vector<8x256xf32>
    %61 = vector.shape_cast %19 : vector<8x256xf32> to vector<1x8x256xf32>
    tpu.vector_store %arg3[%c0_35, %c0_36, %c0_37], %61 {strides = array<i32>} : memref<2x8x512xf32, #tpu.memory_space<vmem>>, vector<1x8x256xf32>,
    %c0_38 = arith.constant 0 : index
    %c0_39 = arith.constant 0 : index
    %c256_40 = arith.constant 256 : index
    %62 = vector.load %arg3[%c0_38, %c0_39, %c256_40] : memref<2x8x512xf32, #tpu.memory_space<vmem>>, vector<1x8x128xf32>
    %63 = vector.shape_cast %62 : vector<1x8x128xf32> to vector<8x128xf32>
    %64 = vector.shape_cast %27 : vector<8x128xf32> to vector<1x8x128xf32>
    tpu.vector_store %arg3[%c0_38, %c0_39, %c256_40], %64 {strides = array<i32>} : memref<2x8x512xf32, #tpu.memory_space<vmem>>, vector<1x8x128xf32>,
    %c0_41 = arith.constant 0 : index
    %c0_42 = arith.constant 0 : index
    %c384_43 = arith.constant 384 : index
    %65 = vector.load %arg3[%c0_41, %c0_42, %c384_43] : memref<2x8x512xf32, #tpu.memory_space<vmem>>, vector<1x8x128xf32>
    %66 = vector.shape_cast %65 : vector<1x8x128xf32> to vector<8x128xf32>
    %67 = vector.shape_cast %25 : vector<8x128xf32> to vector<1x8x128xf32>
    tpu.vector_store %arg3[%c0_41, %c0_42, %c384_43], %67 {strides = array<i32>} : memref<2x8x512xf32, #tpu.memory_space<vmem>>, vector<1x8x128xf32>,
    %c1 = arith.constant 1 : index
    %c0_44 = arith.constant 0 : index
    %c0_45 = arith.constant 0 : index
    %68 = vector.load %arg0[%c1, %c0_44, %c0_45] : memref<2x8x256xf32, #tpu.memory_space<vmem>>, vector<1x8x128xf32>
    %69 = vector.shape_cast %68 : vector<1x8x128xf32> to vector<8x128xf32>
    %c1_46 = arith.constant 1 : index
    %c0_47 = arith.constant 0 : index
    %c128_48 = arith.constant 128 : index
    %70 = vector.load %arg0[%c1_46, %c0_47, %c128_48] : memref<2x8x256xf32, #tpu.memory_space<vmem>>, vector<1x8x128xf32>
    %71 = vector.shape_cast %70 : vector<1x8x128xf32> to vector<8x128xf32>
    %c1_49 = arith.constant 1 : index
    %c0_50 = arith.constant 0 : index
    %c0_51 = arith.constant 0 : index
    %72 = vector.load %arg1[%c1_49, %c0_50, %c0_51] : memref<2x520x256xf32, #tpu.memory_space<vmem>>, vector<1x128x128xf32>
    %73 = vector.shape_cast %72 : vector<1x128x128xf32> to vector<128x128xf32>
    %c1_52 = arith.constant 1 : index
    %c512_53 = arith.constant 512 : index
    %c0_54 = arith.constant 0 : index
    %74 = vector.load %arg1[%c1_52, %c512_53, %c0_54] : memref<2x520x256xf32, #tpu.memory_space<vmem>>, vector<1x1x128xf32>
    %75 = vector.shape_cast %74 : vector<1x1x128xf32> to vector<1x128xf32>
    %cst_55 = arith.constant dense<0.000000e+00> : vector<8x128xf32>
    %76 = tpu.matmul %69, %73, %cst_55 {dimension_numbers = #tpu.dot_dimension_numbers<[1], [0], [0], [1], [0, 0, 1, 1], [], []>} : vector<8x128xf32>, vector<128x128xf32>, vector<8x128xf32> -> vector<8x128xf32>
    %77 = vector.broadcast %75 : vector<1x128xf32> to vector<8x128xf32>
    %78 = arith.addf %76, %77 : vector<8x128xf32>
    %cst_56 = arith.constant 0.000000e+00 : f32
    %79 = vector.broadcast %cst_56 : f32 to vector<8x128xf32>
    %80 = arith.maximumf %78, %79 : vector<8x128xf32>
    %c1_57 = arith.constant 1 : index
    %c128_58 = arith.constant 128 : index
    %c0_59 = arith.constant 0 : index
    %81 = vector.load %arg1[%c1_57, %c128_58, %c0_59] : memref<2x520x256xf32, #tpu.memory_space<vmem>>, vector<1x128x256xf32>
    %82 = vector.shape_cast %81 : vector<1x128x256xf32> to vector<128x256xf32>
    %c1_60 = arith.constant 1 : index
    %c513_61 = arith.constant 513 : index
    %c0_62 = arith.constant 0 : index
    %83 = vector.load %arg1[%c1_60, %c513_61, %c0_62] : memref<2x520x256xf32, #tpu.memory_space<vmem>>, vector<1x1x256xf32>
    %84 = vector.shape_cast %83 : vector<1x1x256xf32> to vector<1x256xf32>
    %cst_63 = arith.constant dense<0.000000e+00> : vector<8x256xf32>
    %85 = tpu.matmul %80, %82, %cst_63 {dimension_numbers = #tpu.dot_dimension_numbers<[1], [0], [0], [1], [0, 0, 1, 1], [], []>} : vector<8x128xf32>, vector<128x256xf32>, vector<8x256xf32> -> vector<8x256xf32>
    %86 = vector.broadcast %84 : vector<1x256xf32> to vector<8x256xf32>
    %87 = arith.addf %85, %86 : vector<8x256xf32>
    %88 = vector.extract_strided_slice %87 {offsets = [0, 0], sizes = [8, 128], strides = [1, 1]} : vector<8x256xf32> to vector<8x128xf32>
    %89 = vector.extract_strided_slice %87 {offsets = [0, 128], sizes = [8, 128], strides = [1, 1]} : vector<8x256xf32> to vector<8x128xf32>
    %cst_64 = arith.constant 5.000000e-01 : f32
    %90 = vector.broadcast %cst_64 : f32 to vector<8x128xf32>
    %91 = arith.mulf %90, %89 : vector<8x128xf32>
    %92 = math.exp %91 : vector<8x128xf32>
    %93 = arith.mulf %92, %92 : vector<8x128xf32>
    %94 = arith.mulf %92, %71 : vector<8x128xf32>
    %95 = arith.addf %88, %94 : vector<8x128xf32>
    %c1_65 = arith.constant 1 : index
    %c256_66 = arith.constant 256 : index
    %c0_67 = arith.constant 0 : index
    %96 = vector.load %arg1[%c1_65, %c256_66, %c0_67] : memref<2x520x256xf32, #tpu.memory_space<vmem>>, vector<1x128x128xf32>
    %97 = vector.shape_cast %96 : vector<1x128x128xf32> to vector<128x128xf32>
    %c1_68 = arith.constant 1 : index
    %c514_69 = arith.constant 514 : index
    %c0_70 = arith.constant 0 : index
    %98 = vector.load %arg1[%c1_68, %c514_69, %c0_70] : memref<2x520x256xf32, #tpu.memory_space<vmem>>, vector<1x1x128xf32>
    %99 = vector.shape_cast %98 : vector<1x1x128xf32> to vector<1x128xf32>
    %cst_71 = arith.constant dense<0.000000e+00> : vector<8x128xf32>
    %100 = tpu.matmul %95, %97, %cst_71 {dimension_numbers = #tpu.dot_dimension_numbers<[1], [0], [0], [1], [0, 0, 1, 1], [], []>} : vector<8x128xf32>, vector<128x128xf32>, vector<8x128xf32> -> vector<8x128xf32>
    %101 = vector.broadcast %99 : vector<1x128xf32> to vector<8x128xf32>
    %102 = arith.addf %100, %101 : vector<8x128xf32>
    %cst_72 = arith.constant 0.000000e+00 : f32
    %103 = vector.broadcast %cst_72 : f32 to vector<8x128xf32>
    %104 = arith.maximumf %102, %103 : vector<8x128xf32>
    %c1_73 = arith.constant 1 : index
    %c384_74 = arith.constant 384 : index
    %c0_75 = arith.constant 0 : index
    %105 = vector.load %arg1[%c1_73, %c384_74, %c0_75] : memref<2x520x256xf32, #tpu.memory_space<vmem>>, vector<1x128x128xf32>
    %106 = vector.shape_cast %105 : vector<1x128x128xf32> to vector<128x128xf32>
    %c1_76 = arith.constant 1 : index
    %c515_77 = arith.constant 515 : index
    %c0_78 = arith.constant 0 : index
    %107 = vector.load %arg1[%c1_76, %c515_77, %c0_78] : memref<2x520x256xf32, #tpu.memory_space<vmem>>, vector<1x1x128xf32>
    %108 = vector.shape_cast %107 : vector<1x1x128xf32> to vector<1x128xf32>
    %cst_79 = arith.constant dense<0.000000e+00> : vector<8x128xf32>
    %109 = tpu.matmul %104, %106, %cst_79 {dimension_numbers = #tpu.dot_dimension_numbers<[1], [0], [0], [1], [0, 0, 1, 1], [], []>} : vector<8x128xf32>, vector<128x128xf32>, vector<8x128xf32> -> vector<8x128xf32>
    %110 = vector.broadcast %108 : vector<1x128xf32> to vector<8x128xf32>
    %111 = arith.addf %109, %110 : vector<8x128xf32>
    %112 = math.absf %111 : vector<8x128xf32>
    %cst_80 = arith.constant 0.000000e+00 : f32
    %113 = vector.broadcast %cst_80 : f32 to vector<8x128xf32>
    %114 = arith.subf %113, %112 : vector<8x128xf32>
    %115 = math.exp %114 : vector<8x128xf32>
    %cst_81 = arith.constant 1.000000e+00 : f32
    %116 = vector.broadcast %cst_81 : f32 to vector<8x128xf32>
    %117 = arith.addf %116, %115 : vector<8x128xf32>
    %118 = arith.divf %115, %117 : vector<8x128xf32>
    %cst_82 = arith.constant 0.000000e+00 : f32
    %119 = vector.broadcast %cst_82 : f32 to vector<8x128xf32>
    %120 = arith.cmpf oge, %111, %119 : vector<8x128xf32>
    %cst_83 = arith.constant 1.000000e+00 : f32
    %121 = vector.broadcast %cst_83 : f32 to vector<8x128xf32>
    %122 = arith.subf %121, %118 : vector<8x128xf32>
    %123 = arith.select %120, %122, %118 : vector<8x128xi1>, vector<8x128xf32>
    %c1_84 = arith.constant 1 : index
    %c0_85 = arith.constant 0 : index
    %c0_86 = arith.constant 0 : index
    %124 = vector.load %arg2[%c1_84, %c0_85, %c0_86] : memref<2x8x128xf32, #tpu.memory_space<vmem>>, vector<1x8x128xf32>
    %125 = vector.shape_cast %124 : vector<1x8x128xf32> to vector<8x128xf32>
    %126 = vector.shape_cast %123 : vector<8x128xf32> to vector<1x8x128xf32>
    tpu.vector_store %arg2[%c1_84, %c0_85, %c0_86], %126 {strides = array<i32>} : memref<2x8x128xf32, #tpu.memory_space<vmem>>, vector<1x8x128xf32>,
    %c1_87 = arith.constant 1 : index
    %c0_88 = arith.constant 0 : index
    %c0_89 = arith.constant 0 : index
    %127 = vector.load %arg3[%c1_87, %c0_88, %c0_89] : memref<2x8x512xf32, #tpu.memory_space<vmem>>, vector<1x8x256xf32>
    %128 = vector.shape_cast %127 : vector<1x8x256xf32> to vector<8x256xf32>
    %129 = vector.shape_cast %87 : vector<8x256xf32> to vector<1x8x256xf32>
    tpu.vector_store %arg3[%c1_87, %c0_88, %c0_89], %129 {strides = array<i32>} : memref<2x8x512xf32, #tpu.memory_space<vmem>>, vector<1x8x256xf32>,
    %c1_90 = arith.constant 1 : index
    %c0_91 = arith.constant 0 : index
    %c256_92 = arith.constant 256 : index
    %130 = vector.load %arg3[%c1_90, %c0_91, %c256_92] : memref<2x8x512xf32, #tpu.memory_space<vmem>>, vector<1x8x128xf32>
    %131 = vector.shape_cast %130 : vector<1x8x128xf32> to vector<8x128xf32>
    %132 = vector.shape_cast %95 : vector<8x128xf32> to vector<1x8x128xf32>
    tpu.vector_store %arg3[%c1_90, %c0_91, %c256_92], %132 {strides = array<i32>} : memref<2x8x512xf32, #tpu.memory_space<vmem>>, vector<1x8x128xf32>,
    %c1_93 = arith.constant 1 : index
    %c0_94 = arith.constant 0 : index
    %c384_95 = arith.constant 384 : index
    %133 = vector.load %arg3[%c1_93, %c0_94, %c384_95] : memref<2x8x512xf32, #tpu.memory_space<vmem>>, vector<1x8x128xf32>
    %134 = vector.shape_cast %133 : vector<1x8x128xf32> to vector<8x128xf32>
    %135 = vector.shape_cast %93 : vector<8x128xf32> to vector<1x8x128xf32>
    tpu.vector_store %arg3[%c1_93, %c0_94, %c384_95], %135 {strides = array<i32>} : memref<2x8x512xf32, #tpu.memory_space<vmem>>, vector<1x8x128xf32>,
    return
  }
}

</mosaic_0001>

<llo_original>
// kernel: corvae_forward.1
$region0: #{corvae_forward.1}
  #allocation0 [shape = 'u32[]', space=smem, size = 0x4, offset = 0x4, fixed_abs, tag = 'smem constant byte address 0x4 - core index']
  #allocation1 [shape = 'u32[144,128]{1,0:T(1,128)}', space=vmem, size = 0x12000, scoped, tag = 'internal scratch']
  %s0 = inlined_call_operand.vmem [shape: f32[2,8,256], index: 0, kind: input, shape index: {}]
  %s1 = inlined_call_operand.hbm [shape: f32[2,520,256], index: 1, kind: input, shape index: {}]
  %s2 = inlined_call_operand.vmem [shape: f32[2,8,128], index: 2, kind: output, shape index: {0}]
  %s3 = inlined_call_operand.vmem [shape: f32[2,8,512], index: 3, kind: output, shape index: {1}]
  %4 = xla_tuple %s2, %s3
  %s5 = sld [smem:[#allocation0]]
  $region30: #{corvae_forward.1} parent=0
    _
  %s7 = ssub.s32 1, %s5
  %s8 = scalar_select 0, %s7, %s5
  $region1: #{corvae_forward.1} parent=0
    #allocation2 [shape = 'u8[1064960]{0}', space=vmem, size = 0x104000, scoped, tag = 'input window, operand 1, single buffered']
    #allocation3 [shape = 's32[1]{0}', space=sflag, size = 0x4, scoped, tag = 'scoped memory for corvae_forward.1']
    %9 = vsyncpa [#allocation3], 0
    // Predicated region
    $region2: #{corvae_forward.1} parent=1 // pred_check
      _
    $region3: #{corvae_forward.1} parent=1 // pred_check_branch
      %11 = sbr.rel (0) target = $region5
    $region4: #{corvae_forward.1} parent=1 // pred_region
      _
    $region5: #{corvae_forward.1} parent=1 // pred_fallthru
      _
    // Predicated region
    $region6: #{corvae_forward.1} parent=1 // pred_check
      _
    $region7: #{corvae_forward.1} parent=1 // pred_check_branch
      %13 = sbr.rel (0) target = $region9
    $region8: #{corvae_forward.1} parent=1 // pred_region
      %s15 = ssub.s32 33280, 33280
      %16 = vsyncadd [#allocation3], %s15
      %s17 = sshll.u32 [#allocation2], 4
      %s18 = int_to_ptr.vmem [resolvable:$true] %s17
      %23 = dma.hbm_to_vmem [thread:$0]  %s1, 33280, %s18, [#allocation3], 256, 256, 16
    $region9: #{corvae_forward.1} parent=1 // pred_fallthru
      _
    // Predicated region
    $region10: #{corvae_forward.1} parent=1 // pred_check
      _
    $region11: #{corvae_forward.1} parent=1 // pred_check_branch
      %25 = sbr.rel (0) target = $region13
    $region12: #{corvae_forward.1} parent=1 // pred_region
      %26 = dma.done [#allocation3], 33280
    $region13: #{corvae_forward.1} parent=1 // pred_fallthru
      _
    %v27 = vld [vmem:[%s0] sm:$0xff]
    %v28 = vld [vmem:[%s0 + $0x8] sm:$0xff]
    %v29 = vld [vmem:[#allocation2] sm:$0xff]
    %v30 = vld [vmem:[#allocation2 + $0x10] sm:$0xff]
    %v31 = vld [vmem:[#allocation2 + $0x20] sm:$0xff]
    %v32 = vld [vmem:[#allocation2 + $0x30] sm:$0xff]
    %v33 = vld [vmem:[#allocation2 + $0x40] sm:$0xff]
    %v34 = vld [vmem:[#allocation2 + $0x50] sm:$0xff]
    %v35 = vld [vmem:[#allocation2 + $0x60] sm:$0xff]
    %v36 = vld [vmem:[#allocation2 + $0x70] sm:$0xff]
    %v37 = vld [vmem:[#allocation2 + $0x80] sm:$0xff]
    %v38 = vld [vmem:[#allocation2 + $0x90] sm:$0xff]
    %v39 = vld [vmem:[#allocation2 + $0xa0] sm:$0xff]
    %v40 = vld [vmem:[#allocation2 + $0xb0] sm:$0xff]
    %v41 = vld [vmem:[#allocation2 + $0xc0] sm:$0xff]
    %v42 = vld [vmem:[#allocation2 + $0xd0] sm:$0xff]
    %v43 = vld [vmem:[#allocation2 + $0xe0] sm:$0xff]
    %v44 = vld [vmem:[#allocation2 + $0xf0] sm:$0xff]
    %v45 = vld [vmem:[#allocation2 + $0x400] ss:$0 sm:$0xff]
    %46 = vmatprep.subr.mxu0 0.0
    %47 = vmatpush1.msra.mxu0 %v29
    %48 = vmatprep.subr.mxu0 0.0
    %49 = vmatpush1.msra.mxu0 %v30
    %50 = vmatprep.subr.mxu0 0.0
    %51 = vmatpush1.msra.mxu0 %v31
    %52 = vmatprep.subr.mxu0 0.0
    %53 = vmatpush1.msra.mxu0 %v32
    %54 = vmatprep.subr.mxu0 0.0
    %55 = vmatpush1.msra.mxu0 %v33
    %56 = vmatprep.subr.mxu0 0.0
    %57 = vmatpush1.msra.mxu0 %v34
    %58 = vmatprep.subr.mxu0 0.0
    %59 = vmatpush1.msra.mxu0 %v35
    %60 = vmatprep.subr.mxu0 0.0
    %61 = vmatpush1.msra.mxu0 %v36
    %62 = vmatprep.subr.mxu0 0.0
    %63 = vmatpush1.msra.mxu0 %v37
    %64 = vmatprep.subr.mxu0 0.0
    %65 = vmatpush1.msra.mxu0 %v38
    %66 = vmatprep.subr.mxu0 0.0
    %67 = vmatpush1.msra.mxu0 %v39
    %68 = vmatprep.subr.mxu0 0.0
    %69 = vmatpush1.msra.mxu0 %v40
    %70 = vmatprep.subr.mxu0 0.0
    %71 = vmatpush1.msra.mxu0 %v41
    %72 = vmatprep.subr.mxu0 0.0
    %73 = vmatpush1.msra.mxu0 %v42
    %74 = vmatprep.subr.mxu0 0.0
    %75 = vmatpush1.msra.mxu0 %v43
    %76 = vmatprep.subr.mxu0 0.0
    %77 = vmatpush1.msra.mxu0 %v44
    %78 = vmatprep.subr.mxu0 0.0
    %79 = vmatpush1.msra.mxu0 0.0
    %80 = vmatprep.subr.mxu0 0.0
    %81 = vmatpush1.msra.mxu0 0.0
    %82 = vmatprep.subr.mxu0 0.0
    %83 = vmatpush1.msra.mxu0 0.0
    %84 = vmatprep.subr.mxu0 0.0
    %85 = vmatpush1.msra.mxu0 0.0
    %86 = vmatprep.subr.mxu0 0.0
    %87 = vmatpush1.msra.mxu0 0.0
    %88 = vmatprep.subr.mxu0 0.0
    %89 = vmatpush1.msra.mxu0 0.0
    %90 = vmatprep.subr.mxu0 0.0
    %91 = vmatpush1.msra.mxu0 0.0
    %92 = vmatprep.subr.mxu0 0.0
    %93 = vmatpush1.msra.mxu0 0.0
    %94 = vmatprep.subr.mxu0 0.0
    %95 = vmatpush1.msra.mxu0 0.0
    %96 = vmatprep.subr.mxu0 0.0
    %97 = vmatpush1.msra.mxu0 0.0
    %98 = vmatprep.subr.mxu0 0.0
    %99 = vmatpush1.msra.mxu0 0.0
    %100 = vmatprep.subr.mxu0 0.0
    %101 = vmatpush1.msra.mxu0 0.0
    %102 = vmatprep.subr.mxu0 0.0
    %103 = vmatpush1.msra.mxu0 0.0
    %104 = vmatprep.subr.mxu0 0.0
    %105 = vmatpush1.msra.mxu0 0.0
    %106 = vmatprep.subr.mxu0 0.0
    %107 = vmatpush1.msra.mxu0 0.0
    %108 = vmatprep.subr.mxu0 0.0
    %109 = vmatpush1.msra.mxu0 0.0
    %110 = vmatprep.mubr.f32.mxu0 0.0
    %111 = vmatmul.mubr.f32.gmra.mrb[0].mxu0 %v27
    %v112 = vpop.f32.mrb[0].mxu0
    %v113 = vadd.f32 %v45, %v112
    %v114 = vpop.f32.mrb[0].mxu0
    %115 = vdwg.mxu0
    %v116 = vmax.f32 %v113, 0.0
    %v117 = vld [vmem:[#allocation2 + $0x100] sm:$0xff]
    %v118 = vld [vmem:[#allocation2 + $0x108] sm:$0xff]
    %v119 = vld [vmem:[#allocation2 + $0x110] sm:$0xff]
    %v120 = vld [vmem:[#allocation2 + $0x118] sm:$0xff]
    %v121 = vld [vmem:[#allocation2 + $0x120] sm:$0xff]
    %v122 = vld [vmem:[#allocation2 + $0x128] sm:$0xff]
    %v123 = vld [vmem:[#allocation2 + $0x130] sm:$0xff]
    %v124 = vld [vmem:[#allocation2 + $0x138] sm:$0xff]
    %v125 = vld [vmem:[#allocation2 + $0x140] sm:$0xff]
    %v126 = vld [vmem:[#allocation2 + $0x148] sm:$0xff]
    %v127 = vld [vmem:[#allocation2 + $0x150] sm:$0xff]
    %v128 = vld [vmem:[#allocation2 + $0x158] sm:$0xff]
    %v129 = vld [vmem:[#allocation2 + $0x160] sm:$0xff]
    %v130 = vld [vmem:[#allocation2 + $0x168] sm:$0xff]
    %v131 = vld [vmem:[#allocation2 + $0x170] sm:$0xff]
    %v132 = vld [vmem:[#allocation2 + $0x178] sm:$0xff]
    %v133 = vld [vmem:[#allocation2 + $0x180] sm:$0xff]
    %v134 = vld [vmem:[#allocation2 + $0x188] sm:$0xff]
    %v135 = vld [vmem:[#allocation2 + $0x190] sm:$0xff]
    %v136 = vld [vmem:[#allocation2 + $0x198] sm:$0xff]
    %v137 = vld [vmem:[#allocation2 + $0x1a0] sm:$0xff]
    %v138 = vld [vmem:[#allocation2 + $0x1a8] sm:$0xff]
    %v139 = vld [vmem:[#allocation2 + $0x1b0] sm:$0xff]
    %v140 = vld [vmem:[#allocation2 + $0x1b8] sm:$0xff]
    %v141 = vld [vmem:[#allocation2 + $0x1c0] sm:$0xff]
    %v142 = vld [vmem:[#allocation2 + $0x1c8] sm:$0xff]
    %v143 = vld [vmem:[#allocation2 + $0x1d0] sm:$0xff]
    %v144 = vld [vmem:[#allocation2 + $0x1d8] sm:$0xff]
    %v145 = vld [vmem:[#allocation2 + $0x1e0] sm:$0xff]
    %v146 = vld [vmem:[#allocation2 + $0x1e8] sm:$0xff]
    %v147 = vld [vmem:[#allocation2 + $0x1f0] sm:$0xff]
    %v148 = vld [vmem:[#allocation2 + $0x1f8] sm:$0xff]
    %s149 = scalar_lea.vmem [#allocation2], 1025
    %v150 = vld [vmem:[%s149] ss:$8 sm:$0x3]
    %v152 = vlaneseq
    %v153 = vshrl.u32 %v152, 7
    %v154 = vsub.s32 0, %v153
    %v155 = vrot.slane %v150, %v154
    %v156 = vlaneseq
    %v157 = vshrl.u32 %v156, 7
    %v158 = vsub.s32 1, %v157
    %v159 = vrot.slane %v150, %v158
    %162 = vmatprep.subr.mxu0 %v118
    %163 = vmatpush1.msra.mxu0 %v117
    %164 = vmatprep.subr.mxu0 %v120
    %165 = vmatpush1.msra.mxu0 %v119
    %166 = vmatprep.subr.mxu0 %v122
    %167 = vmatpush1.msra.mxu0 %v121
    %168 = vmatprep.subr.mxu0 %v124
    %169 = vmatpush1.msra.mxu0 %v123
    %170 = vmatprep.subr.mxu0 %v126
    %171 = vmatpush1.msra.mxu0 %v125
    %172 = vmatprep.subr.mxu0 %v128
    %173 = vmatpush1.msra.mxu0 %v127
    %174 = vmatprep.subr.mxu0 %v130
    %175 = vmatpush1.msra.mxu0 %v129
    %176 = vmatprep.subr.mxu0 %v132
    %177 = vmatpush1.msra.mxu0 %v131
    %178 = vmatprep.subr.mxu0 %v134
    %179 = vmatpush1.msra.mxu0 %v133
    %180 = vmatprep.subr.mxu0 %v136
    %181 = vmatpush1.msra.mxu0 %v135
    %182 = vmatprep.subr.mxu0 %v138
    %183 = vmatpush1.msra.mxu0 %v137
    %184 = vmatprep.subr.mxu0 %v140
    %185 = vmatpush1.msra.mxu0 %v139
    %186 = vmatprep.subr.mxu0 %v142
    %187 = vmatpush1.msra.mxu0 %v141
    %188 = vmatprep.subr.mxu0 %v144
    %189 = vmatpush1.msra.mxu0 %v143
    %190 = vmatprep.subr.mxu0 %v146
    %191 = vmatpush1.msra.mxu0 %v145
    %192 = vmatprep.subr.mxu0 %v148
    %193 = vmatpush1.msra.mxu0 %v147
    %194 = vmatprep.subr.mxu0 0.0
    %195 = vmatpush1.msra.mxu0 0.0
    %196 = vmatprep.subr.mxu0 0.0
    %197 = vmatpush1.msra.mxu0 0.0
    %198 = vmatprep.subr.mxu0 0.0
    %199 = vmatpush1.msra.mxu0 0.0
    %200 = vmatprep.subr.mxu0 0.0
    %201 = vmatpush1.msra.mxu0 0.0
    %202 = vmatprep.subr.mxu0 0.0
    %203 = vmatpush1.msra.mxu0 0.0
    %204 = vmatprep.subr.mxu0 0.0
    %205 = vmatpush1.msra.mxu0 0.0
    %206 = vmatprep.subr.mxu0 0.0
    %207 = vmatpush1.msra.mxu0 0.0
    %208 = vmatprep.subr.mxu0 0.0
    %209 = vmatpush1.msra.mxu0 0.0
    %210 = vmatprep.subr.mxu0 0.0
    %211 = vmatpush1.msra.mxu0 0.0
    %212 = vmatprep.subr.mxu0 0.0
    %213 = vmatpush1.msra.mxu0 0.0
    %214 = vmatprep.subr.mxu0 0.0
    %215 = vmatpush1.msra.mxu0 0.0
    %216 = vmatprep.subr.mxu0 0.0
    %217 = vmatpush1.msra.mxu0 0.0
    %218 = vmatprep.subr.mxu0 0.0
    %219 = vmatpush1.msra.mxu0 0.0
    %220 = vmatprep.subr.mxu0 0.0
    %221 = vmatpush1.msra.mxu0 0.0
    %222 = vmatprep.subr.mxu0 0.0
    %223 = vmatpush1.msra.mxu0 0.0
    %224 = vmatprep.subr.mxu0 0.0
    %225 = vmatpush1.msra.mxu0 0.0
    %226 = vmatprep.mubr.f32.mxu0 0.0
    %227 = vmatmul.mubr.f32.gmra.mrb[0].mxu0 %v116
    %v228 = vpop.f32.mrb[0].mxu0
    %v229 = vadd.f32 %v155, %v228
    %v230 = vpop.f32.mrb[0].mxu0
    %v231 = vadd.f32 %v159, %v230
    %232 = vdwg.mxu0
    %v233 = vmul.f32 %v231, 0.5
    %v234 = vmul.f32 %v233, 1.442695
    %v235 = vpow.pop %v234
    %v236 = vmul.f32 %v235, %v235
    %v237 = vmul.f32 %v235, %v28
    %v238 = vadd.f32 %v229, %v237
    %v239 = vld [vmem:[#allocation2 + $0x200] sm:$0xff]
    %v240 = vld [vmem:[#allocation2 + $0x210] sm:$0xff]
    %v241 = vld [vmem:[#allocation2 + $0x220] sm:$0xff]
    %v242 = vld [vmem:[#allocation2 + $0x230] sm:$0xff]
    %v243 = vld [vmem:[#allocation2 + $0x240] sm:$0xff]
    %v244 = vld [vmem:[#allocation2 + $0x250] sm:$0xff]
    %v245 = vld [vmem:[#allocation2 + $0x260] sm:$0xff]
    %v246 = vld [vmem:[#allocation2 + $0x270] sm:$0xff]
    %v247 = vld [vmem:[#allocation2 + $0x280] sm:$0xff]
    %v248 = vld [vmem:[#allocation2 + $0x290] sm:$0xff]
    %v249 = vld [vmem:[#allocation2 + $0x2a0] sm:$0xff]
    %v250 = vld [vmem:[#allocation2 + $0x2b0] sm:$0xff]
    %v251 = vld [vmem:[#allocation2 + $0x2c0] sm:$0xff]
    %v252 = vld [vmem:[#allocation2 + $0x2d0] sm:$0xff]
    %v253 = vld [vmem:[#allocation2 + $0x2e0] sm:$0xff]
    %v254 = vld [vmem:[#allocation2 + $0x2f0] sm:$0xff]
    %v255 = vld [vmem:[#allocation2 + $0x402] ss:$0 sm:$0xff]
    %256 = vmatprep.subr.mxu0 0.0
    %257 = vmatpush1.msra.mxu0 %v239
    %258 = vmatprep.subr.mxu0 0.0
    %259 = vmatpush1.msra.mxu0 %v240
    %260 = vmatprep.subr.mxu0 0.0
    %261 = vmatpush1.msra.mxu0 %v241
    %262 = vmatprep.subr.mxu0 0.0
    %263 = vmatpush1.msra.mxu0 %v242
    %264 = vmatprep.subr.mxu0 0.0
    %265 = vmatpush1.msra.mxu0 %v243
    %266 = vmatprep.subr.mxu0 0.0
    %267 = vmatpush1.msra.mxu0 %v244
    %268 = vmatprep.subr.mxu0 0.0
    %269 = vmatpush1.msra.mxu0 %v245
    %270 = vmatprep.subr.mxu0 0.0
    %271 = vmatpush1.msra.mxu0 %v246
    %272 = vmatprep.subr.mxu0 0.0
    %273 = vmatpush1.msra.mxu0 %v247
    %274 = vmatprep.subr.mxu0 0.0
    %275 = vmatpush1.msra.mxu0 %v248
    %276 = vmatprep.subr.mxu0 0.0
    %277 = vmatpush1.msra.mxu0 %v249
    %278 = vmatprep.subr.mxu0 0.0
    %279 = vmatpush1.msra.mxu0 %v250
    %280 = vmatprep.subr.mxu0 0.0
    %281 = vmatpush1.msra.mxu0 %v251
    %282 = vmatprep.subr.mxu0 0.0
    %283 = vmatpush1.msra.mxu0 %v252
    %284 = vmatprep.subr.mxu0 0.0
    %285 = vmatpush1.msra.mxu0 %v253
    %286 = vmatprep.subr.mxu0 0.0
    %287 = vmatpush1.msra.mxu0 %v254
    %288 = vmatprep.subr.mxu0 0.0
    %289 = vmatpush1.msra.mxu0 0.0
    %290 = vmatprep.subr.mxu0 0.0
    %291 = vmatpush1.msra.mxu0 0.0
    %292 = vmatprep.subr.mxu0 0.0
    %293 = vmatpush1.msra.mxu0 0.0
    %294 = vmatprep.subr.mxu0 0.0
    %295 = vmatpush1.msra.mxu0 0.0
    %296 = vmatprep.subr.mxu0 0.0
    %297 = vmatpush1.msra.mxu0 0.0
    %298 = vmatprep.subr.mxu0 0.0
    %299 = vmatpush1.msra.mxu0 0.0
    %300 = vmatprep.subr.mxu0 0.0
    %301 = vmatpush1.msra.mxu0 0.0
    %302 = vmatprep.subr.mxu0 0.0
    %303 = vmatpush1.msra.mxu0 0.0
    %304 = vmatprep.subr.mxu0 0.0
    %305 = vmatpush1.msra.mxu0 0.0
    %306 = vmatprep.subr.mxu0 0.0
    %307 = vmatpush1.msra.mxu0 0.0
    %308 = vmatprep.subr.mxu0 0.0
    %309 = vmatpush1.msra.mxu0 0.0
    %310 = vmatprep.subr.mxu0 0.0
    %311 = vmatpush1.msra.mxu0 0.0
    %312 = vmatprep.subr.mxu0 0.0
    %313 = vmatpush1.msra.mxu0 0.0
    %314 = vmatprep.subr.mxu0 0.0
    %315 = vmatpush1.msra.mxu0 0.0
    %316 = vmatprep.subr.mxu0 0.0
    %317 = vmatpush1.msra.mxu0 0.0
    %318 = vmatprep.subr.mxu0 0.0
    %319 = vmatpush1.msra.mxu0 0.0
    %320 = vmatprep.mubr.f32.mxu0 0.0
    %321 = vmatmul.mubr.f32.gmra.mrb[0].mxu0 %v238
    %v322 = vpop.f32.mrb[0].mxu0
    %v323 = vadd.f32 %v255, %v322
    %v324 = vpop.f32.mrb[0].mxu0
    %325 = vdwg.mxu0
    %v326 = vmax.f32 %v323, 0.0
    %v327 = vld [vmem:[#allocation2 + $0x300] sm:$0xff]
    %v328 = vld [vmem:[#allocation2 + $0x310] sm:$0xff]
    %v329 = vld [vmem:[#allocation2 + $0x320] sm:$0xff]
    %v330 = vld [vmem:[#allocation2 + $0x330] sm:$0xff]
    %v331 = vld [vmem:[#allocation2 + $0x340] sm:$0xff]
    %v332 = vld [vmem:[#allocation2 + $0x350] sm:$0xff]
    %v333 = vld [vmem:[#allocation2 + $0x360] sm:$0xff]
    %v334 = vld [vmem:[#allocation2 + $0x370] sm:$0xff]
    %v335 = vld [vmem:[#allocation2 + $0x380] sm:$0xff]
    %v336 = vld [vmem:[#allocation2 + $0x390] sm:$0xff]
    %v337 = vld [vmem:[#allocation2 + $0x3a0] sm:$0xff]
    %v338 = vld [vmem:[#allocation2 + $0x3b0] sm:$0xff]
    %v339 = vld [vmem:[#allocation2 + $0x3c0] sm:$0xff]
    %v340 = vld [vmem:[#allocation2 + $0x3d0] sm:$0xff]
    %v341 = vld [vmem:[#allocation2 + $0x3e0] sm:$0xff]
    %v342 = vld [vmem:[#allocation2 + $0x3f0] sm:$0xff]
    %v343 = vld [vmem:[#allocation2 + $0x403] ss:$0 sm:$0xff]
    %344 = vmatprep.subr.mxu0 0.0
    %345 = vmatpush1.msra.mxu0 %v327
    %346 = vmatprep.subr.mxu0 0.0
    %347 = vmatpush1.msra.mxu0 %v328
    %348 = vmatprep.subr.mxu0 0.0
    %349 = vmatpush1.msra.mxu0 %v329
    %350 = vmatprep.subr.mxu0 0.0
    %351 = vmatpush1.msra.mxu0 %v330
    %352 = vmatprep.subr.mxu0 0.0
    %353 = vmatpush1.msra.mxu0 %v331
    %354 = vmatprep.subr.mxu0 0.0
    %355 = vmatpush1.msra.mxu0 %v332
    %356 = vmatprep.subr.mxu0 0.0
    %357 = vmatpush1.msra.mxu0 %v333
    %358 = vmatprep.subr.mxu0 0.0
    %359 = vmatpush1.msra.mxu0 %v334
    %360 = vmatprep.subr.mxu0 0.0
    %361 = vmatpush1.msra.mxu0 %v335
    %362 = vmatprep.subr.mxu0 0.0
    %363 = vmatpush1.msra.mxu0 %v336
    %364 = vmatprep.subr.mxu0 0.0
    %365 = vmatpush1.msra.mxu0 %v337
    %366 = vmatprep.subr.mxu0 0.0
    %367 = vmatpush1.msra.mxu0 %v338
    %368 = vmatprep.subr.mxu0 0.0
    %369 = vmatpush1.msra.mxu0 %v339
    %370 = vmatprep.subr.mxu0 0.0
    %371 = vmatpush1.msra.mxu0 %v340
    %372 = vmatprep.subr.mxu0 0.0
    %373 = vmatpush1.msra.mxu0 %v341
    %374 = vmatprep.subr.mxu0 0.0
    %375 = vmatpush1.msra.mxu0 %v342
    %376 = vmatprep.subr.mxu0 0.0
    %377 = vmatpush1.msra.mxu0 0.0
    %378 = vmatprep.subr.mxu0 0.0
    %379 = vmatpush1.msra.mxu0 0.0
    %380 = vmatprep.subr.mxu0 0.0
    %381 = vmatpush1.msra.mxu0 0.0
    %382 = vmatprep.subr.mxu0 0.0
    %383 = vmatpush1.msra.mxu0 0.0
    %384 = vmatprep.subr.mxu0 0.0
    %385 = vmatpush1.msra.mxu0 0.0
    %386 = vmatprep.subr.mxu0 0.0
    %387 = vmatpush1.msra.mxu0 0.0
    %388 = vmatprep.subr.mxu0 0.0
    %389 = vmatpush1.msra.mxu0 0.0
    %390 = vmatprep.subr.mxu0 0.0
    %391 = vmatpush1.msra.mxu0 0.0
    %392 = vmatprep.subr.mxu0 0.0
    %393 = vmatpush1.msra.mxu0 0.0
    %394 = vmatprep.subr.mxu0 0.0
    %395 = vmatpush1.msra.mxu0 0.0
    %396 = vmatprep.subr.mxu0 0.0
    %397 = vmatpush1.msra.mxu0 0.0
    %398 = vmatprep.subr.mxu0 0.0
    %399 = vmatpush1.msra.mxu0 0.0
    %400 = vmatprep.subr.mxu0 0.0
    %401 = vmatpush1.msra.mxu0 0.0
    %402 = vmatprep.subr.mxu0 0.0
    %403 = vmatpush1.msra.mxu0 0.0
    %404 = vmatprep.subr.mxu0 0.0
    %405 = vmatpush1.msra.mxu0 0.0
    %406 = vmatprep.subr.mxu0 0.0
    %407 = vmatpush1.msra.mxu0 0.0
    %408 = vmatprep.mubr.f32.mxu0 0.0
    %409 = vmatmul.mubr.f32.gmra.mrb[0].mxu0 %v326
    %v410 = vpop.f32.mrb[0].mxu0
    %v411 = vadd.f32 %v343, %v410
    %v412 = vpop.f32.mrb[0].mxu0
    %413 = vdwg.mxu0
    %v414 = vand.u32 2147483647, %v411
    %v415 = vsub.f32 0.0, %v414
    %v416 = vmul.f32 %v415, 1.442695
    %v417 = vpow.pop %v416
    %v418 = vadd.f32 %v417, 1.0
    %v419 = vrcp.pop %v418
    %v420 = vmul.f32 %v417, %v419
    %vm421 = vcmp.ge.f32.partialorder %v411, 0.0
    %v422 = vsub.f32 1.0, %v420
    %v423 = vsel %vm421, %v422, %v420
    %424 = vst [vmem:[%s2] sm:$0xff] %v423
    %425 = vst [vmem:[%s3] sm:$0xff] %v229
    %426 = vst [vmem:[%s3 + $0x8] sm:$0xff] %v231
    %427 = vst [vmem:[%s3 + $0x10] sm:$0xff] %v238
    %428 = vst [vmem:[%s3 + $0x18] sm:$0xff] %v236
    %s429 = scalar_lea.vmem %s0, 16
    %v430 = vld [vmem:[%s429] sm:$0xff]
    %v431 = vld [vmem:[%s429 + $0x8] sm:$0xff]
    %s432 = scalar_lea.vmem [#allocation2], 1040
    %v433 = vld [vmem:[%s432] sm:$0xff]
    %v434 = vld [vmem:[%s432 + $0x10] sm:$0xff]
    %v435 = vld [vmem:[%s432 + $0x20] sm:$0xff]
    %v436 = vld [vmem:[%s432 + $0x30] sm:$0xff]
    %v437 = vld [vmem:[%s432 + $0x40] sm:$0xff]
    %v438 = vld [vmem:[%s432 + $0x50] sm:$0xff]
    %v439 = vld [vmem:[%s432 + $0x60] sm:$0xff]
    %v440 = vld [vmem:[%s432 + $0x70] sm:$0xff]
    %v441 = vld [vmem:[%s432 + $0x80] sm:$0xff]
    %v442 = vld [vmem:[%s432 + $0x90] sm:$0xff]
    %v443 = vld [vmem:[%s432 + $0xa0] sm:$0xff]
    %v444 = vld [vmem:[%s432 + $0xb0] sm:$0xff]
    %v445 = vld [vmem:[%s432 + $0xc0] sm:$0xff]
    %v446 = vld [vmem:[%s432 + $0xd0] sm:$0xff]
    %v447 = vld [vmem:[%s432 + $0xe0] sm:$0xff]
    %v448 = vld [vmem:[%s432 + $0xf0] sm:$0xff]
    %v449 = vld [vmem:[%s432 + $0x400] ss:$0 sm:$0xff]
    %450 = vmatprep.subr.mxu0 0.0
    %451 = vmatpush1.msra.mxu0 %v433
    %452 = vmatprep.subr.mxu0 0.0
    %453 = vmatpush1.msra.mxu0 %v434
    %454 = vmatprep.subr.mxu0 0.0
    %455 = vmatpush1.msra.mxu0 %v435
    %456 = vmatprep.subr.mxu0 0.0
    %457 = vmatpush1.msra.mxu0 %v436
    %458 = vmatprep.subr.mxu0 0.0
    %459 = vmatpush1.msra.mxu0 %v437
    %460 = vmatprep.subr.mxu0 0.0
    %461 = vmatpush1.msra.mxu0 %v438
    %462 = vmatprep.subr.mxu0 0.0
    %463 = vmatpush1.msra.mxu0 %v439
    %464 = vmatprep.subr.mxu0 0.0
    %465 = vmatpush1.msra.mxu0 %v440
    %466 = vmatprep.subr.mxu0 0.0
    %467 = vmatpush1.msra.mxu0 %v441
    %468 = vmatprep.subr.mxu0 0.0
    %469 = vmatpush1.msra.mxu0 %v442
    %470 = vmatprep.subr.mxu0 0.0
    %471 = vmatpush1.msra.mxu0 %v443
    %472 = vmatprep.subr.mxu0 0.0
    %473 = vmatpush1.msra.mxu0 %v444
    %474 = vmatprep.subr.mxu0 0.0
    %475 = vmatpush1.msra.mxu0 %v445
    %476 = vmatprep.subr.mxu0 0.0
    %477 = vmatpush1.msra.mxu0 %v446
    %478 = vmatprep.subr.mxu0 0.0
    %479 = vmatpush1.msra.mxu0 %v447
    %480 = vmatprep.subr.mxu0 0.0
    %481 = vmatpush1.msra.mxu0 %v448
    %482 = vmatprep.subr.mxu0 0.0
    %483 = vmatpush1.msra.mxu0 0.0
    %484 = vmatprep.subr.mxu0 0.0
    %485 = vmatpush1.msra.mxu0 0.0
    %486 = vmatprep.subr.mxu0 0.0
    %487 = vmatpush1.msra.mxu0 0.0
    %488 = vmatprep.subr.mxu0 0.0
    %489 = vmatpush1.msra.mxu0 0.0
    %490 = vmatprep.subr.mxu0 0.0
    %491 = vmatpush1.msra.mxu0 0.0
    %492 = vmatprep.subr.mxu0 0.0
    %493 = vmatpush1.msra.mxu0 0.0
    %494 = vmatprep.subr.mxu0 0.0
    %495 = vmatpush1.msra.mxu0 0.0
    %496 = vmatprep.subr.mxu0 0.0
    %497 = vmatpush1.msra.mxu0 0.0
    %498 = vmatprep.subr.mxu0 0.0
    %499 = vmatpush1.msra.mxu0 0.0
    %500 = vmatprep.subr.mxu0 0.0
    %501 = vmatpush1.msra.mxu0 0.0
    %502 = vmatprep.subr.mxu0 0.0
    %503 = vmatpush1.msra.mxu0 0.0
    %504 = vmatprep.subr.mxu0 0.0
    %505 = vmatpush1.msra.mxu0 0.0
    %506 = vmatprep.subr.mxu0 0.0
    %507 = vmatpush1.msra.mxu0 0.0
    %508 = vmatprep.subr.mxu0 0.0
    %509 = vmatpush1.msra.mxu0 0.0
    %510 = vmatprep.subr.mxu0 0.0
    %511 = vmatpush1.msra.mxu0 0.0
    %512 = vmatprep.subr.mxu0 0.0
    %513 = vmatpush1.msra.mxu0 0.0
    %514 = vmatprep.mubr.f32.mxu0 0.0
    %515 = vmatmul.mubr.f32.gmra.mrb[0].mxu0 %v430
    %v516 = vpop.f32.mrb[0].mxu0
    %v517 = vadd.f32 %v449, %v516
    %v518 = vpop.f32.mrb[0].mxu0
    %519 = vdwg.mxu0
    %v520 = vmax.f32 %v517, 0.0
    %v521 = vld [vmem:[%s432 + $0x100] sm:$0xff]
    %v522 = vld [vmem:[%s432 + $0x108] sm:$0xff]
    %v523 = vld [vmem:[%s432 + $0x110] sm:$0xff]
    %v524 = vld [vmem:[%s432 + $0x118] sm:$0xff]
    %v525 = vld [vmem:[%s432 + $0x120] sm:$0xff]
    %v526 = vld [vmem:[%s432 + $0x128] sm:$0xff]
    %v527 = vld [vmem:[%s432 + $0x130] sm:$0xff]
    %v528 = vld [vmem:[%s432 + $0x138] sm:$0xff]
    %v529 = vld [vmem:[%s432 + $0x140] sm:$0xff]
    %v530 = vld [vmem:[%s432 + $0x148] sm:$0xff]
    %v531 = vld [vmem:[%s432 + $0x150] sm:$0xff]
    %v532 = vld [vmem:[%s432 + $0x158] sm:$0xff]
    %v533 = vld [vmem:[%s432 + $0x160] sm:$0xff]
    %v534 = vld [vmem:[%s432 + $0x168] sm:$0xff]
    %v535 = vld [vmem:[%s432 + $0x170] sm:$0xff]
    %v536 = vld [vmem:[%s432 + $0x178] sm:$0xff]
    %v537 = vld [vmem:[%s432 + $0x180] sm:$0xff]
    %v538 = vld [vmem:[%s432 + $0x188] sm:$0xff]
    %v539 = vld [vmem:[%s432 + $0x190] sm:$0xff]
    %v540 = vld [vmem:[%s432 + $0x198] sm:$0xff]
    %v541 = vld [vmem:[%s432 + $0x1a0] sm:$0xff]
    %v542 = vld [vmem:[%s432 + $0x1a8] sm:$0xff]
    %v543 = vld [vmem:[%s432 + $0x1b0] sm:$0xff]
    %v544 = vld [vmem:[%s432 + $0x1b8] sm:$0xff]
    %v545 = vld [vmem:[%s432 + $0x1c0] sm:$0xff]
    %v546 = vld [vmem:[%s432 + $0x1c8] sm:$0xff]
    %v547 = vld [vmem:[%s432 + $0x1d0] sm:$0xff]
    %v548 = vld [vmem:[%s432 + $0x1d8] sm:$0xff]
    %v549 = vld [vmem:[%s432 + $0x1e0] sm:$0xff]
    %v550 = vld [vmem:[%s432 + $0x1e8] sm:$0xff]
    %v551 = vld [vmem:[%s432 + $0x1f0] sm:$0xff]
    %v552 = vld [vmem:[%s432 + $0x1f8] sm:$0xff]
    %s553 = scalar_lea.vmem %s432, 1025 [#allocation2]
    %v554 = vld [vmem:[%s553] ss:$8 sm:$0x3]
    %v556 = vlaneseq
    %v557 = vshrl.u32 %v556, 7
    %v558 = vsub.s32 0, %v557
    %v559 = vrot.slane %v554, %v558
    %v560 = vlaneseq
    %v561 = vshrl.u32 %v560, 7
    %v562 = vsub.s32 1, %v561
    %v563 = vrot.slane %v554, %v562
    %566 = vmatprep.subr.mxu0 %v522
    %567 = vmatpush1.msra.mxu0 %v521
    %568 = vmatprep.subr.mxu0 %v524
    %569 = vmatpush1.msra.mxu0 %v523
    %570 = vmatprep.subr.mxu0 %v526
    %571 = vmatpush1.msra.mxu0 %v525
    %572 = vmatprep.subr.mxu0 %v528
    %573 = vmatpush1.msra.mxu0 %v527
    %574 = vmatprep.subr.mxu0 %v530
    %575 = vmatpush1.msra.mxu0 %v529
    %576 = vmatprep.subr.mxu0 %v532
    %577 = vmatpush1.msra.mxu0 %v531
    %578 = vmatprep.subr.mxu0 %v534
    %579 = vmatpush1.msra.mxu0 %v533
    %580 = vmatprep.subr.mxu0 %v536
    %581 = vmatpush1.msra.mxu0 %v535
    %582 = vmatprep.subr.mxu0 %v538
    %583 = vmatpush1.msra.mxu0 %v537
    %584 = vmatprep.subr.mxu0 %v540
    %585 = vmatpush1.msra.mxu0 %v539
    %586 = vmatprep.subr.mxu0 %v542
    %587 = vmatpush1.msra.mxu0 %v541
    %588 = vmatprep.subr.mxu0 %v544
    %589 = vmatpush1.msra.mxu0 %v543
    %590 = vmatprep.subr.mxu0 %v546
    %591 = vmatpush1.msra.mxu0 %v545
    %592 = vmatprep.subr.mxu0 %v548
    %593 = vmatpush1.msra.mxu0 %v547
    %594 = vmatprep.subr.mxu0 %v550
    %595 = vmatpush1.msra.mxu0 %v549
    %596 = vmatprep.subr.mxu0 %v552
    %597 = vmatpush1.msra.mxu0 %v551
    %598 = vmatprep.subr.mxu0 0.0
    %599 = vmatpush1.msra.mxu0 0.0
    %600 = vmatprep.subr.mxu0 0.0
    %601 = vmatpush1.msra.mxu0 0.0
    %602 = vmatprep.subr.mxu0 0.0
    %603 = vmatpush1.msra.mxu0 0.0
    %604 = vmatprep.subr.mxu0 0.0
    %605 = vmatpush1.msra.mxu0 0.0
    %606 = vmatprep.subr.mxu0 0.0
    %607 = vmatpush1.msra.mxu0 0.0
    %608 = vmatprep.subr.mxu0 0.0
    %609 = vmatpush1.msra.mxu0 0.0
    %610 = vmatprep.subr.mxu0 0.0
    %611 = vmatpush1.msra.mxu0 0.0
    %612 = vmatprep.subr.mxu0 0.0
    %613 = vmatpush1.msra.mxu0 0.0
    %614 = vmatprep.subr.mxu0 0.0
    %615 = vmatpush1.msra.mxu0 0.0
    %616 = vmatprep.subr.mxu0 0.0
    %617 = vmatpush1.msra.mxu0 0.0
    %618 = vmatprep.subr.mxu0 0.0
    %619 = vmatpush1.msra.mxu0 0.0
    %620 = vmatprep.subr.mxu0 0.0
    %621 = vmatpush1.msra.mxu0 0.0
    %622 = vmatprep.subr.mxu0 0.0
    %623 = vmatpush1.msra.mxu0 0.0
    %624 = vmatprep.subr.mxu0 0.0
    %625 = vmatpush1.msra.mxu0 0.0
    %626 = vmatprep.subr.mxu0 0.0
    %627 = vmatpush1.msra.mxu0 0.0
    %628 = vmatprep.subr.mxu0 0.0
    %629 = vmatpush1.msra.mxu0 0.0
    %630 = vmatprep.mubr.f32.mxu0 0.0
    %631 = vmatmul.mubr.f32.gmra.mrb[0].mxu0 %v520
    %v632 = vpop.f32.mrb[0].mxu0
    %v633 = vadd.f32 %v559, %v632
    %v634 = vpop.f32.mrb[0].mxu0
    %v635 = vadd.f32 %v563, %v634
    %636 = vdwg.mxu0
    %v637 = vmul.f32 %v635, 0.5
    %v638 = vmul.f32 %v637, 1.442695
    %v639 = vpow.pop %v638
    %v640 = vmul.f32 %v639, %v639
    %v641 = vmul.f32 %v639, %v431
    %v642 = vadd.f32 %v633, %v641
    %v643 = vld [vmem:[%s432 + $0x200] sm:$0xff]
    %v644 = vld [vmem:[%s432 + $0x210] sm:$0xff]
    %v645 = vld [vmem:[%s432 + $0x220] sm:$0xff]
    %v646 = vld [vmem:[%s432 + $0x230] sm:$0xff]
    %v647 = vld [vmem:[%s432 + $0x240] sm:$0xff]
    %v648 = vld [vmem:[%s432 + $0x250] sm:$0xff]
    %v649 = vld [vmem:[%s432 + $0x260] sm:$0xff]
    %v650 = vld [vmem:[%s432 + $0x270] sm:$0xff]
    %v651 = vld [vmem:[%s432 + $0x280] sm:$0xff]
    %v652 = vld [vmem:[%s432 + $0x290] sm:$0xff]
    %v653 = vld [vmem:[%s432 + $0x2a0] sm:$0xff]
    %v654 = vld [vmem:[%s432 + $0x2b0] sm:$0xff]
    %v655 = vld [vmem:[%s432 + $0x2c0] sm:$0xff]
    %v656 = vld [vmem:[%s432 + $0x2d0] sm:$0xff]
    %v657 = vld [vmem:[%s432 + $0x2e0] sm:$0xff]
    %v658 = vld [vmem:[%s432 + $0x2f0] sm:$0xff]
    %v659 = vld [vmem:[%s432 + $0x402] ss:$0 sm:$0xff]
    %660 = vmatprep.subr.mxu0 0.0
    %661 = vmatpush1.msra.mxu0 %v643
    %662 = vmatprep.subr.mxu0 0.0
    %663 = vmatpush1.msra.mxu0 %v644
    %664 = vmatprep.subr.mxu0 0.0
    %665 = vmatpush1.msra.mxu0 %v645
    %666 = vmatprep.subr.mxu0 0.0
    %667 = vmatpush1.msra.mxu0 %v646
    %668 = vmatprep.subr.mxu0 0.0
    %669 = vmatpush1.msra.mxu0 %v647
    %670 = vmatprep.subr.mxu0 0.0
    %671 = vmatpush1.msra.mxu0 %v648
    %672 = vmatprep.subr.mxu0 0.0
    %673 = vmatpush1.msra.mxu0 %v649
    %674 = vmatprep.subr.mxu0 0.0
    %675 = vmatpush1.msra.mxu0 %v650
    %676 = vmatprep.subr.mxu0 0.0
    %677 = vmatpush1.msra.mxu0 %v651
    %678 = vmatprep.subr.mxu0 0.0
    %679 = vmatpush1.msra.mxu0 %v652
    %680 = vmatprep.subr.mxu0 0.0
    %681 = vmatpush1.msra.mxu0 %v653
    %682 = vmatprep.subr.mxu0 0.0
    %683 = vmatpush1.msra.mxu0 %v654
    %684 = vmatprep.subr.mxu0 0.0
    %685 = vmatpush1.msra.mxu0 %v655
    %686 = vmatprep.subr.mxu0 0.0
    %687 = vmatpush1.msra.mxu0 %v656
    %688 = vmatprep.subr.mxu0 0.0
    %689 = vmatpush1.msra.mxu0 %v657
    %690 = vmatprep.subr.mxu0 0.0
    %691 = vmatpush1.msra.mxu0 %v658
    %692 = vmatprep.subr.mxu0 0.0
    %693 = vmatpush1.msra.mxu0 0.0
    %694 = vmatprep.subr.mxu0 0.0
    %695 = vmatpush1.msra.mxu0 0.0
    %696 = vmatprep.subr.mxu0 0.0
    %697 = vmatpush1.msra.mxu0 0.0
    %698 = vmatprep.subr.mxu0 0.0
    %699 = vmatpush1.msra.mxu0 0.0
    %700 = vmatprep.subr.mxu0 0.0
    %701 = vmatpush1.msra.mxu0 0.0
    %702 = vmatprep.subr.mxu0 0.0
    %703 = vmatpush1.msra.mxu0 0.0
    %704 = vmatprep.subr.mxu0 0.0
    %705 = vmatpush1.msra.mxu0 0.0
    %706 = vmatprep.subr.mxu0 0.0
    %707 = vmatpush1.msra.mxu0 0.0
    %708 = vmatprep.subr.mxu0 0.0
    %709 = vmatpush1.msra.mxu0 0.0
    %710 = vmatprep.subr.mxu0 0.0
    %711 = vmatpush1.msra.mxu0 0.0
    %712 = vmatprep.subr.mxu0 0.0
    %713 = vmatpush1.msra.mxu0 0.0
    %714 = vmatprep.subr.mxu0 0.0
    %715 = vmatpush1.msra.mxu0 0.0
    %716 = vmatprep.subr.mxu0 0.0
    %717 = vmatpush1.msra.mxu0 0.0
    %718 = vmatprep.subr.mxu0 0.0
    %719 = vmatpush1.msra.mxu0 0.0
    %720 = vmatprep.subr.mxu0 0.0
    %721 = vmatpush1.msra.mxu0 0.0
    %722 = vmatprep.subr.mxu0 0.0
    %723 = vmatpush1.msra.mxu0 0.0
    %724 = vmatprep.mubr.f32.mxu0 0.0
    %725 = vmatmul.mubr.f32.gmra.mrb[0].mxu0 %v642
    %v726 = vpop.f32.mrb[0].mxu0
    %v727 = vadd.f32 %v659, %v726
    %v728 = vpop.f32.mrb[0].mxu0
    %729 = vdwg.mxu0
    %v730 = vmax.f32 %v727, 0.0
    %v731 = vld [vmem:[%s432 + $0x300] sm:$0xff]
    %v732 = vld [vmem:[%s432 + $0x310] sm:$0xff]
    %v733 = vld [vmem:[%s432 + $0x320] sm:$0xff]
    %v734 = vld [vmem:[%s432 + $0x330] sm:$0xff]
    %v735 = vld [vmem:[%s432 + $0x340] sm:$0xff]
    %v736 = vld [vmem:[%s432 + $0x350] sm:$0xff]
    %v737 = vld [vmem:[%s432 + $0x360] sm:$0xff]
    %v738 = vld [vmem:[%s432 + $0x370] sm:$0xff]
    %v739 = vld [vmem:[%s432 + $0x380] sm:$0xff]
    %v740 = vld [vmem:[%s432 + $0x390] sm:$0xff]
    %v741 = vld [vmem:[%s432 + $0x3a0] sm:$0xff]
    %v742 = vld [vmem:[%s432 + $0x3b0] sm:$0xff]
    %v743 = vld [vmem:[%s432 + $0x3c0] sm:$0xff]
    %v744 = vld [vmem:[%s432 + $0x3d0] sm:$0xff]
    %v745 = vld [vmem:[%s432 + $0x3e0] sm:$0xff]
    %v746 = vld [vmem:[%s432 + $0x3f0] sm:$0xff]
    %v747 = vld [vmem:[%s432 + $0x403] ss:$0 sm:$0xff]
    %748 = vmatprep.subr.mxu0 0.0
    %749 = vmatpush1.msra.mxu0 %v731
    %750 = vmatprep.subr.mxu0 0.0
    %751 = vmatpush1.msra.mxu0 %v732
    %752 = vmatprep.subr.mxu0 0.0
    %753 = vmatpush1.msra.mxu0 %v733
    %754 = vmatprep.subr.mxu0 0.0
    %755 = vmatpush1.msra.mxu0 %v734
    %756 = vmatprep.subr.mxu0 0.0
    %757 = vmatpush1.msra.mxu0 %v735
    %758 = vmatprep.subr.mxu0 0.0
    %759 = vmatpush1.msra.mxu0 %v736
    %760 = vmatprep.subr.mxu0 0.0
    %761 = vmatpush1.msra.mxu0 %v737
    %762 = vmatprep.subr.mxu0 0.0
    %763 = vmatpush1.msra.mxu0 %v738
    %764 = vmatprep.subr.mxu0 0.0
    %765 = vmatpush1.msra.mxu0 %v739
    %766 = vmatprep.subr.mxu0 0.0
    %767 = vmatpush1.msra.mxu0 %v740
    %768 = vmatprep.subr.mxu0 0.0
    %769 = vmatpush1.msra.mxu0 %v741
    %770 = vmatprep.subr.mxu0 0.0
    %771 = vmatpush1.msra.mxu0 %v742
    %772 = vmatprep.subr.mxu0 0.0
    %773 = vmatpush1.msra.mxu0 %v743
    %774 = vmatprep.subr.mxu0 0.0
    %775 = vmatpush1.msra.mxu0 %v744
    %776 = vmatprep.subr.mxu0 0.0
    %777 = vmatpush1.msra.mxu0 %v745
    %778 = vmatprep.subr.mxu0 0.0
    %779 = vmatpush1.msra.mxu0 %v746
    %780 = vmatprep.subr.mxu0 0.0
    %781 = vmatpush1.msra.mxu0 0.0
    %782 = vmatprep.subr.mxu0 0.0
    %783 = vmatpush1.msra.mxu0 0.0
    %784 = vmatprep.subr.mxu0 0.0
    %785 = vmatpush1.msra.mxu0 0.0
    %786 = vmatprep.subr.mxu0 0.0
    %787 = vmatpush1.msra.mxu0 0.0
    %788 = vmatprep.subr.mxu0 0.0
    %789 = vmatpush1.msra.mxu0 0.0
    %790 = vmatprep.subr.mxu0 0.0
    %791 = vmatpush1.msra.mxu0 0.0
    %792 = vmatprep.subr.mxu0 0.0
    %793 = vmatpush1.msra.mxu0 0.0
    %794 = vmatprep.subr.mxu0 0.0
    %795 = vmatpush1.msra.mxu0 0.0
    %796 = vmatprep.subr.mxu0 0.0
    %797 = vmatpush1.msra.mxu0 0.0
    %798 = vmatprep.subr.mxu0 0.0
    %799 = vmatpush1.msra.mxu0 0.0
    %800 = vmatprep.subr.mxu0 0.0
    %801 = vmatpush1.msra.mxu0 0.0
    %802 = vmatprep.subr.mxu0 0.0
    %803 = vmatpush1.msra.mxu0 0.0
    %804 = vmatprep.subr.mxu0 0.0
    %805 = vmatpush1.msra.mxu0 0.0
    %806 = vmatprep.subr.mxu0 0.0
    %807 = vmatpush1.msra.mxu0 0.0
    %808 = vmatprep.subr.mxu0 0.0
    %809 = vmatpush1.msra.mxu0 0.0
    %810 = vmatprep.subr.mxu0 0.0
    %811 = vmatpush1.msra.mxu0 0.0
    %812 = vmatprep.mubr.f32.mxu0 0.0
    %813 = vmatmul.mubr.f32.gmra.mrb[0].mxu0 %v730
    %v814 = vpop.f32.mrb[0].mxu0
    %v815 = vadd.f32 %v747, %v814
    %v816 = vpop.f32.mrb[0].mxu0
    %817 = vdwg.mxu0
    %v818 = vand.u32 2147483647, %v815
    %v819 = vsub.f32 0.0, %v818
    %v820 = vmul.f32 %v819, 1.442695
    %v821 = vpow.pop %v820
    %v822 = vadd.f32 %v821, 1.0
    %v823 = vrcp.pop %v822
    %v824 = vmul.f32 %v821, %v823
    %vm825 = vcmp.ge.f32.partialorder %v815, 0.0
    %v826 = vsub.f32 1.0, %v824
    %v827 = vsel %vm825, %v826, %v824
    %s828 = scalar_lea.vmem %s2, 8
    %829 = vst [vmem:[%s828] sm:$0xff] %v827
    %s830 = scalar_lea.vmem %s3, 32
    %831 = vst [vmem:[%s830] sm:$0xff] %v633
    %832 = vst [vmem:[%s830 + $0x8] sm:$0xff] %v635
    %833 = vst [vmem:[%s830 + $0x10] sm:$0xff] %v642
    %834 = vst [vmem:[%s830 + $0x18] sm:$0xff] %v640
    // Predicated region
    $region14: #{corvae_forward.1} parent=1 // pred_check
      _
    $region15: #{corvae_forward.1} parent=1 // pred_check_branch
      %836 = sbr.rel (0) target = $region17
    $region16: #{corvae_forward.1} parent=1 // pred_region
      _
    $region17: #{corvae_forward.1} parent=1 // pred_fallthru
      _
    // Predicated region
    $region18: #{corvae_forward.1} parent=1 // pred_check
      _
    $region19: #{corvae_forward.1} parent=1 // pred_check_branch
      %838 = sbr.rel (0) target = $region21
    $region20: #{corvae_forward.1} parent=1 // pred_region
      _
    $region21: #{corvae_forward.1} parent=1 // pred_fallthru
      _
    // Predicated region
    $region22: #{corvae_forward.1} parent=1 // pred_check
      _
    $region23: #{corvae_forward.1} parent=1 // pred_check_branch
      %840 = sbr.rel (0) target = $region25
    $region24: #{corvae_forward.1} parent=1 // pred_region
      _
    $region25: #{corvae_forward.1} parent=1 // pred_fallthru
      _
    // Predicated region
    $region26: #{corvae_forward.1} parent=1 // pred_check
      _
    $region27: #{corvae_forward.1} parent=1 // pred_check_branch
      %842 = sbr.rel (0) target = $region29
    $region28: #{corvae_forward.1} parent=1 // pred_region
      _
    $region29: #{corvae_forward.1} parent=1 // pred_fallthru
      _
    %843 = vsyncpa [#allocation3], 1

</llo_original>
